<compile_context>
chip_gen: v6e
topology: v6e:2x2x1
jax: 0.10.0
libtpu: 0.0.40
codegen_flags: <defaults>
</compile_context>

<pallas_src>
import functools

import jax
import jax.numpy as jnp
from jax import lax
from jax.experimental import pallas as pl
from jax.experimental.pallas import tpu as pltpu

_LANE = 128
_SUBLANE = 8


def _round_up(v, m):
    return ((v + m - 1) // m) * m


def _nonlinear_classifier_kernel(x_ref, w1_ref, b1_ref, w2_ref, b2_ref, *rest,
                                 layer_norm: bool, eps: float, mxu_dtype):
    if layer_norm:
        g_ref, beta_ref, o_ref = rest
    else:
        o_ref = rest[0]

    x = x_ref[...].astype(jnp.float32)          # no-op for f32 inputs
    w1 = w1_ref[...]
    w2 = w2_ref[...]

    if mxu_dtype is not None:                   # feed MXU in bf16, accumulate in f32
        x_mm = x.astype(mxu_dtype)
        w1 = w1.astype(mxu_dtype)
        w2 = w2.astype(mxu_dtype)
    else:
        x_mm = x

    # Contract feature dims directly against the PyTorch (out, in) layout: x @ W^T.
    nt_dims = (((1,), (1,)), ((), ()))

    h = lax.dot_general(x_mm, w1, nt_dims, preferred_element_type=jnp.float32)
    h = h + b1_ref[...]
    h = jnp.maximum(h, 0.0)                     # ReLU (f32 on the VPU)

    if layer_norm:
        # One-pass stats: sum and sum-of-squares (single traversal, 2 XLU reductions).
        inv_h = 1.0 / h.shape[-1]
        s1 = jnp.sum(h, axis=-1, keepdims=True)
        s2 = jnp.sum(h * h, axis=-1, keepdims=True)
        mean = s1 * inv_h
        var = jnp.maximum(s2 * inv_h - mean * mean, 0.0)   # biased var; guard tiny negatives
        h = (h - mean) * lax.rsqrt(var + eps)              # rsqrt -> EUP slot (free-ish)
        h = h * g_ref[...] + beta_ref[...]

    h_mm = h.astype(mxu_dtype) if mxu_dtype is not None else h
    out = lax.dot_general(h_mm, w2, nt_dims, preferred_element_type=jnp.float32)
    out = out + b2_ref[...]
    o_ref[...] = out.astype(o_ref.dtype)


def non_linear_classifier(x, w1, b1, w2, b2, gamma=None, beta=None, *,
                          layer_norm=False, eps=1e-5, mxu_dtype=None):
    """Forward pass of NonLinearClassifier as a single Pallas kernel.

    x : (B, in_features)
    w1: (num_hidden, in_features)   (PyTorch nn.Linear layout, NOT transposed)
    b1: (num_hidden,)
    w2: (num_classes, num_hidden)
    b2: (num_classes,)
    gamma/beta: (num_hidden,) LayerNorm affine params (used iff layer_norm)
    """
    B, in_f = x.shape
    H, in_f_w = w1.shape
    C, H_w = w2.shape
    assert in_f_w == in_f and H_w == H and b1.shape == (H,) and b2.shape == (C,)

    # --- lane-dense output: zero-pad the class dim to a multiple of 128 ---------------
    # (padded W2 rows / b2 entries are zero; wrapper slices the result back to C)
    C_pad = _round_up(C, _LANE)
    if C_pad != C:
        w2_p = jnp.pad(w2, ((0, C_pad - C), (0, 0)))
        b2_p = jnp.pad(b2, ((0, C_pad - C),))
    else:
        w2_p, b2_p = w2, b2

    b1_2d = b1.reshape(1, H)            # free reshapes (no data movement)
    b2_2d = b2_p.reshape(1, C_pad)

    ln_args = []
    if layer_norm:
        if gamma is None:
            gamma = jnp.ones((H,), jnp.float32)
        if beta is None:
            beta = jnp.zeros((H,), jnp.float32)
        ln_args = [gamma.reshape(1, H), beta.reshape(1, H)]

    # --- batch tiling: VMEM-budgeted, pipelined, megacore-friendly --------------------
    BPE = 4  # f32 bytes

    def _vmem_bytes(tb):
        resident = (in_f * H + C_pad * H + H + C_pad + (2 * H if layer_norm else 0)) * BPE
        streamed = 2 * tb * in_f * BPE + 2 * tb * C_pad * BPE   # double-buffered x / out
        working = 2 * tb * H * BPE                              # h + temporaries
        return resident + streamed + working

    VMEM_BUDGET = 24 * 1024 * 1024       # fits v7x (64 MiB physical) with headroom
    tb = min(_round_up(B, _SUBLANE), 512)
    while tb > _SUBLANE and _vmem_bytes(tb) > VMEM_BUDGET:
        tb -= _SUBLANE
    # Keep >= 2 grid points when the batch allows it (v7x: 2 TensorCores per chip).
    if B > _SUBLANE and pl.cdiv(B, tb) < 2:
        tb = max(_SUBLANE, _round_up(pl.cdiv(B, 2), _SUBLANE))
    grid = (pl.cdiv(B, tb),)
    # NOTE: a partial last tile is safe — all ops are row-independent; OOB input rows
    # only produce OOB output rows whose stores Pallas masks out.

    in_specs = [
        pl.BlockSpec((tb, in_f), lambda i: (i, 0)),          # x: streamed over batch
        pl.BlockSpec((H, in_f), lambda i: (0, 0)),           # W1: resident across steps
        pl.BlockSpec((1, H), lambda i: (0, 0)),              # b1
        pl.BlockSpec((C_pad, H), lambda i: (0, 0)),          # W2 (classes padded to 128)
        pl.BlockSpec((1, C_pad), lambda i: (0, 0)),          # b2
    ]
    if layer_norm:
        in_specs += [pl.BlockSpec((1, H), lambda i: (0, 0)),  # gamma
                     pl.BlockSpec((1, H), lambda i: (0, 0))]  # beta

    flops = 2 * B * (in_f * H + H * C_pad) + (10 * B * H if layer_norm else 2 * B * H)
    bytes_accessed = (B * in_f + H * in_f + H + C_pad * H + C_pad + B * C_pad
                      + (2 * H if layer_norm else 0)) * BPE
    cost = pl.CostEstimate(flops=flops,
                           transcendentals=B if layer_norm else 0,
                           bytes_accessed=bytes_accessed)

    kernel = functools.partial(_nonlinear_classifier_kernel,
                               layer_norm=layer_norm, eps=eps, mxu_dtype=mxu_dtype)

    out_pad = pl.pallas_call(
        kernel,
        out_shape=jax.ShapeDtypeStruct((B, C_pad), jnp.float32),
        grid_spec=pltpu.PrefetchScalarGridSpec(
            num_scalar_prefetch=0,
            grid=grid,
            in_specs=in_specs,
            out_specs=pl.BlockSpec((tb, C_pad), lambda i: (i, 0)),
        ),
        compiler_params=pltpu.CompilerParams(
            dimension_semantics=("parallel",),
            vmem_limit_bytes=32 * 1024 * 1024,
        ),
        cost_estimate=cost,
    )(x, w1, b1_2d, w2_p, b2_2d, *ln_args)

    return out_pad[:, :C] if C_pad != C else out_pad


if __name__ == "__main__":
    # Small shapes consistent with the module's (B, in_features) input.
    B, in_features, num_hidden, num_classes = 16, 32, 64, 16
    layer_norm = True

    key = jax.random.PRNGKey(0)
    kx, kw1, kb1, kw2, kb2 = jax.random.split(key, 5)

    x = jax.random.normal(kx, (B, in_features), jnp.float32)

    # PyTorch nn.Linear-style uniform init bounds (deterministic).
    bound1 = 1.0 / (in_features ** 0.5)
    w1 = jax.random.uniform(kw1, (num_hidden, in_features), jnp.float32, -bound1, bound1)
    b1 = jax.random.uniform(kb1, (num_hidden,), jnp.float32, -bound1, bound1)
    bound2 = 1.0 / (num_hidden ** 0.5)
    w2 = jax.random.uniform(kw2, (num_classes, num_hidden), jnp.float32, -bound2, bound2)
    b2 = jax.random.uniform(kb2, (num_classes,), jnp.float32, -bound2, bound2)
    gamma = jnp.ones((num_hidden,), jnp.float32)   # nn.LayerNorm defaults
    beta = jnp.zeros((num_hidden,), jnp.float32)

    # LayerNorm path (f32 semantics; set mxu_dtype=jnp.bfloat16 for v6e/v7x throughput).
    out = non_linear_classifier(x, w1, b1, w2, b2, gamma, beta, layer_norm=layer_norm)
    out = jax.block_until_ready(out)

    # Plain path (no gamma/beta shipped at all).
    out_no_ln = non_linear_classifier(x, w1, b1, w2, b2, layer_norm=False)
    out_no_ln = jax.block_until_ready(out_no_ln)

    # Pure-JAX reference (PyTorch semantics: biased variance, eps inside sqrt).
    h = jnp.maximum(x @ w1.T + b1, 0.0)
    ref_no_ln = h @ w2.T + b2
    mu = jnp.mean(h, axis=-1, keepdims=True)
    var = jnp.mean((h - mu) ** 2, axis=-1, keepdims=True)
    h_ln = (h - mu) / jnp.sqrt(var + 1e-5) * gamma + beta
    ref = h_ln @ w2.T + b2

    assert out.shape == (B, num_classes)
    assert out_no_ln.shape == (B, num_classes)
    assert jnp.allclose(out, ref, atol=1e-4, rtol=1e-4)
    assert jnp.allclose(out_no_ln, ref_no_ln, atol=1e-4, rtol=1e-4)
    print("KERNEL_OK")
</pallas_src>

<mosaic_0001>
module attributes {stable_mosaic.version = 11 : i64} {
  func.func @_nonlinear_classifier_kernel(%arg0: i32, %arg1: memref<8x32xf32, #tpu.memory_space<vmem>>, %arg2: memref<64x32xf32, #tpu.memory_space<vmem>>, %arg3: memref<1x64xf32, #tpu.memory_space<vmem>>, %arg4: memref<128x64xf32, #tpu.memory_space<vmem>>, %arg5: memref<1x128xf32, #tpu.memory_space<vmem>>, %arg6: memref<1x64xf32, #tpu.memory_space<vmem>>, %arg7: memref<1x64xf32, #tpu.memory_space<vmem>>, %arg8: memref<8x128xf32, #tpu.memory_space<vmem>>) attributes {dimension_semantics = [#tpu.dimension_semantics<parallel>], iteration_bounds = array<i64: 2>, scalar_prefetch = 0 : i64, scratch_operands = 0 : i64, tpu.core_type = #tpu.core_type<tc>, window_params = [{transform_indices = @transform_0, window_bounds = array<i64: 8, 32>}, {pipeline_mode = #tpu.pipeline_mode<synchronous>, transform_indices = @transform_1, window_bounds = array<i64: 64, 32>}, {pipeline_mode = #tpu.pipeline_mode<synchronous>, transform_indices = @transform_2, window_bounds = array<i64: 1, 64>}, {pipeline_mode = #tpu.pipeline_mode<synchronous>, transform_indices = @transform_3, window_bounds = array<i64: 128, 64>}, {pipeline_mode = #tpu.pipeline_mode<synchronous>, transform_indices = @transform_4, window_bounds = array<i64: 1, 128>}, {pipeline_mode = #tpu.pipeline_mode<synchronous>, transform_indices = @transform_5, window_bounds = array<i64: 1, 64>}, {pipeline_mode = #tpu.pipeline_mode<synchronous>, transform_indices = @transform_6, window_bounds = array<i64: 1, 64>}, {transform_indices = @transform_7, window_bounds = array<i64: 8, 128>}]} {
    %c0 = arith.constant 0 : index
    %c0_0 = arith.constant 0 : index
    %0 = vector.load %arg1[%c0, %c0_0] : memref<8x32xf32, #tpu.memory_space<vmem>>, vector<8x32xf32>
    %c0_1 = arith.constant 0 : index
    %c0_2 = arith.constant 0 : index
    %1 = vector.load %arg2[%c0_1, %c0_2] : memref<64x32xf32, #tpu.memory_space<vmem>>, vector<64x32xf32>
    %c0_3 = arith.constant 0 : index
    %c0_4 = arith.constant 0 : index
    %2 = vector.load %arg4[%c0_3, %c0_4] : memref<128x64xf32, #tpu.memory_space<vmem>>, vector<128x64xf32>
    %cst = arith.constant dense<0.000000e+00> : vector<8x64xf32>
    %3 = tpu.matmul %0, %1, %cst {dimension_numbers = #tpu.dot_dimension_numbers<[1], [1], [0], [0], [0, 0, 1, 0], [], []>} : vector<8x32xf32>, vector<64x32xf32>, vector<8x64xf32> -> vector<8x64xf32>
    %c0_5 = arith.constant 0 : index
    %c0_6 = arith.constant 0 : index
    %4 = vector.load %arg3[%c0_5, %c0_6] : memref<1x64xf32, #tpu.memory_space<vmem>>, vector<1x64xf32>
    %5 = vector.broadcast %4 : vector<1x64xf32> to vector<8x64xf32>
    %6 = arith.addf %3, %5 : vector<8x64xf32>
    %cst_7 = arith.constant 0.000000e+00 : f32
    %7 = vector.broadcast %cst_7 : f32 to vector<8x64xf32>
    %8 = arith.maximumf %6, %7 : vector<8x64xf32>
    %cst_8 = arith.constant dense<0.000000e+00> : vector<8xf32>
    %9 = vector.multi_reduction <add>, %8, %cst_8 [1] : vector<8x64xf32> to vector<8xf32>
    %10 = vector.shape_cast %9 : vector<8xf32> to vector<8x1xf32>
    %11 = arith.mulf %8, %8 : vector<8x64xf32>
    %cst_9 = arith.constant dense<0.000000e+00> : vector<8xf32>
    %12 = vector.multi_reduction <add>, %11, %cst_9 [1] : vector<8x64xf32> to vector<8xf32>
    %13 = vector.shape_cast %12 : vector<8xf32> to vector<8x1xf32>
    %cst_10 = arith.constant 1.562500e-02 : f32
    %14 = vector.broadcast %cst_10 : f32 to vector<8x1xf32>
    %15 = arith.mulf %10, %14 : vector<8x1xf32>
    %cst_11 = arith.constant 1.562500e-02 : f32
    %16 = vector.broadcast %cst_11 : f32 to vector<8x1xf32>
    %17 = arith.mulf %13, %16 : vector<8x1xf32>
    %18 = arith.mulf %15, %15 : vector<8x1xf32>
    %19 = arith.subf %17, %18 : vector<8x1xf32>
    %cst_12 = arith.constant 0.000000e+00 : f32
    %20 = vector.broadcast %cst_12 : f32 to vector<8x1xf32>
    %21 = arith.maximumf %19, %20 : vector<8x1xf32>
    %22 = vector.broadcast %15 : vector<8x1xf32> to vector<8x64xf32>
    %23 = arith.subf %8, %22 : vector<8x64xf32>
    %cst_13 = arith.constant 9.99999974E-6 : f32
    %24 = vector.broadcast %cst_13 : f32 to vector<8x1xf32>
    %25 = arith.addf %21, %24 : vector<8x1xf32>
    %26 = math.rsqrt %25 : vector<8x1xf32>
    %27 = vector.broadcast %26 : vector<8x1xf32> to vector<8x64xf32>
    %28 = arith.mulf %23, %27 : vector<8x64xf32>
    %c0_14 = arith.constant 0 : index
    %c0_15 = arith.constant 0 : index
    %29 = vector.load %arg6[%c0_14, %c0_15] : memref<1x64xf32, #tpu.memory_space<vmem>>, vector<1x64xf32>
    %30 = vector.broadcast %29 : vector<1x64xf32> to vector<8x64xf32>
    %31 = arith.mulf %28, %30 : vector<8x64xf32>
    %c0_16 = arith.constant 0 : index
    %c0_17 = arith.constant 0 : index
    %32 = vector.load %arg7[%c0_16, %c0_17] : memref<1x64xf32, #tpu.memory_space<vmem>>, vector<1x64xf32>
    %33 = vector.broadcast %32 : vector<1x64xf32> to vector<8x64xf32>
    %34 = arith.addf %31, %33 : vector<8x64xf32>
    %cst_18 = arith.constant dense<0.000000e+00> : vector<8x128xf32>
    %35 = tpu.matmul %34, %2, %cst_18 {dimension_numbers = #tpu.dot_dimension_numbers<[1], [1], [0], [0], [0, 0, 1, 0], [], []>} : vector<8x64xf32>, vector<128x64xf32>, vector<8x128xf32> -> vector<8x128xf32>
    %c0_19 = arith.constant 0 : index
    %c0_20 = arith.constant 0 : index
    %36 = vector.load %arg5[%c0_19, %c0_20] : memref<1x128xf32, #tpu.memory_space<vmem>>, vector<1x128xf32>
    %37 = vector.broadcast %36 : vector<1x128xf32> to vector<8x128xf32>
    %38 = arith.addf %35, %37 : vector<8x128xf32>
    %c0_21 = arith.constant 0 : index
    %c0_22 = arith.constant 0 : index
    %39 = vector.load %arg8[%c0_21, %c0_22] : memref<8x128xf32, #tpu.memory_space<vmem>>, vector<8x128xf32>
    tpu.vector_store %arg8[%c0_21, %c0_22], %38 {strides = array<i32>} : memref<8x128xf32, #tpu.memory_space<vmem>>, vector<8x128xf32>,
    return
  }
  func.func @transform_0(%arg0: i32) -> (i32, i32) {
    %c0_i32 = arith.constant 0 : i32
    %c0_i32_0 = arith.constant 0 : i32
    return %arg0, %c0_i32 : i32, i32
  }
  func.func @transform_1(%arg0: i32) -> (i32, i32) {
    %c0_i32 = arith.constant 0 : i32
    %c0_i32_0 = arith.constant 0 : i32
    %c0_i32_1 = arith.constant 0 : i32
    return %c0_i32, %c0_i32_0 : i32, i32
  }
  func.func @transform_2(%arg0: i32) -> (i32, i32) {
    %c0_i32 = arith.constant 0 : i32
    %c0_i32_0 = arith.constant 0 : i32
    %c0_i32_1 = arith.constant 0 : i32
    return %c0_i32, %c0_i32_0 : i32, i32
  }
  func.func @transform_3(%arg0: i32) -> (i32, i32) {
    %c0_i32 = arith.constant 0 : i32
    %c0_i32_0 = arith.constant 0 : i32
    %c0_i32_1 = arith.constant 0 : i32
    return %c0_i32, %c0_i32_0 : i32, i32
  }
  func.func @transform_4(%arg0: i32) -> (i32, i32) {
    %c0_i32 = arith.constant 0 : i32
    %c0_i32_0 = arith.constant 0 : i32
    %c0_i32_1 = arith.constant 0 : i32
    return %c0_i32, %c0_i32_0 : i32, i32
  }
  func.func @transform_5(%arg0: i32) -> (i32, i32) {
    %c0_i32 = arith.constant 0 : i32
    %c0_i32_0 = arith.constant 0 : i32
    %c0_i32_1 = arith.constant 0 : i32
    return %c0_i32, %c0_i32_0 : i32, i32
  }
  func.func @transform_6(%arg0: i32) -> (i32, i32) {
    %c0_i32 = arith.constant 0 : i32
    %c0_i32_0 = arith.constant 0 : i32
    %c0_i32_1 = arith.constant 0 : i32
    return %c0_i32, %c0_i32_0 : i32, i32
  }
  func.func @transform_7(%arg0: i32) -> (i32, i32) {
    %c0_i32 = arith.constant 0 : i32
    %c0_i32_0 = arith.constant 0 : i32
    return %arg0, %c0_i32 : i32, i32
  }
}

</mosaic_0001>

<llo_original>
// kernel: tpu_custom_call.1
$region0: #{tpu_custom_call.1}
  #allocation0 [shape = 'u32[]', space=smem, size = 0x4, offset = 0x4, fixed_abs, tag = 'smem constant byte address 0x4 - core index']
  #allocation1 [shape = 'u32[144,128]{1,0:T(1,128)}', space=vmem, size = 0x12000, scoped, tag = 'internal scratch']
  %s0 = inlined_call_operand.vmem [shape: f32[16,32], index: 0, kind: input, shape index: {}]
  %s1 = inlined_call_operand.vmem [shape: f32[64,32], index: 1, kind: input, shape index: {}]
  %s2 = inlined_call_operand.vmem [shape: f32[1,64], index: 2, kind: input, shape index: {}]
  %s3 = inlined_call_operand.vmem [shape: f32[128,64], index: 3, kind: input, shape index: {}]
  %s4 = inlined_call_operand.vmem [shape: f32[1,128], index: 4, kind: input, shape index: {}]
  %s5 = inlined_call_operand.vmem [shape: f32[1,64], index: 5, kind: input, shape index: {}]
  %s6 = inlined_call_operand.vmem [shape: f32[1,64], index: 6, kind: input, shape index: {}]
  %s7 = inlined_call_operand.hbm [shape: f32[16,128], index: 7, kind: output, shape index: {}]
  %s8 = sld [smem:[#allocation0]]
  $region61: #{tpu_custom_call.1} parent=0
    _
  %s10 = ssub.s32 1, %s8
  %s11 = scalar_select 0, %s10, %s8
  $region1: #{tpu_custom_call.1} parent=0
    #allocation2 [shape = 'u8[8192]{0}', space=vmem, size = 0x2000, scoped, tag = 'output window, operand 0']
    #allocation3 [shape = 's32[2]{0}', space=sflag, size = 0x8, scoped, tag = 'scoped memory for tpu_custom_call.1']
    %12 = vsyncpa [#allocation3], 0
    %s13 = scalar_lea.sflag [#allocation3], 1
    %14 = vsyncpa %s13, 0
    loop: start=0, step=1, limit=4
    $region2: #{tpu_custom_call.1} parent=1 // loop_pre_header
      _
    $region3: #{tpu_custom_call.1} parent=1 // loop_header
      %s16 = sphi 0, %s20
      %p17 = scmp.ge.s32.totalorder %s16, 4
      %s26 = sphi 0, %s28
      %s29 = sphi 0, %s26
      %s30 = sphi 0, %s29
      %s46 = sphi 0, %s30
      %s50 = sphi 0, %s50
      %s52 = sphi 0, %s50
      %s53 = sphi 0, %s52
      %s67 = sphi 0, %s53
      %s71 = sphi 0, %s71
      %s73 = sphi 0, %s71
      %s74 = sphi 0, %s73
      %s88 = sphi 0, %s74
      %s92 = sphi 0, %s92
      %s94 = sphi 0, %s92
      %s95 = sphi 0, %s94
      %s109 = sphi 0, %s95
      %s113 = sphi 0, %s113
      %s115 = sphi 0, %s113
      %s116 = sphi 0, %s115
      %s130 = sphi 0, %s116
      %s134 = sphi 0, %s134
      %s136 = sphi 0, %s134
      %s137 = sphi 0, %s136
      %s151 = sphi 0, %s137
      %s155 = sphi 0, %s155
      %s157 = sphi 0, %s155
      %s158 = sphi 0, %s157
      %s172 = sphi 0, %s158
      %s178 = sphi 0, %s180
      %s181 = sphi 0, %s178
      %s182 = sphi 0, %s181
      %s198 = sphi 0, %s182
    $region4: #{tpu_custom_call.1} parent=1 // loop_header_branch
      %19 = sbr.rel (%p17) target = $region8
    $region5: #{tpu_custom_call.1} parent=1 // loop_body
      %s21 = ssub.s32 %s16, 1
      %s22 = ssub.s32 %s16, 2
      %s23 = sadd.s32 %s16, 1
      %s24 = ssub.s32 %s16, %s23
      %p25 = scmp.eq.s32.totalorder %s24, 0
      %s27 = sadd.s32 %s26, 1
      %s28 = scalar_select %p25, %s26, %s27
      %p31 = pneg %p25
      %p32 = scmp.eq.s32.totalorder %s16, 1
      %p33 = por %p31, %p32
      %p34 = scmp.ne.s32.totalorder %s26, %s29
      %p35 = scmp.eq.s32.totalorder %s16, 0
      %p36 = por %p34, %p35
      %p37 = scmp.ne.s32.totalorder %s26, %s29
      %p38 = scmp.eq.s32.totalorder %s21, 1
      %p39 = por %p37, %p38
      %p40 = scmp.ne.s32.totalorder %s29, %s30
      %p41 = scmp.eq.s32.totalorder %s21, 0
      %p42 = por %p40, %p41
      %p43 = scmp.ne.s32.totalorder %s29, %s30
      %p44 = scmp.eq.s32.totalorder %s22, 1
      %p45 = por %p43, %p44
      %p47 = scmp.ne.s32.totalorder %s30, %s46
      %p48 = scmp.eq.s32.totalorder %s22, 0
      %p49 = por %p47, %p48
      %s51 = sadd.s32 %s50, 1
      %p54 = scmp.eq.s32.totalorder %s16, 1
      %p55 = scmp.ne.s32.totalorder %s50, %s52
      %p56 = scmp.eq.s32.totalorder %s16, 0
      %p57 = por %p55, %p56
      %p58 = scmp.ne.s32.totalorder %s50, %s52
      %p59 = scmp.eq.s32.totalorder %s21, 1
      %p60 = por %p58, %p59
      %p61 = scmp.ne.s32.totalorder %s52, %s53
      %p62 = scmp.eq.s32.totalorder %s21, 0
      %p63 = por %p61, %p62
      %p64 = scmp.ne.s32.totalorder %s52, %s53
      %p65 = scmp.eq.s32.totalorder %s22, 1
      %p66 = por %p64, %p65
      %p68 = scmp.ne.s32.totalorder %s53, %s67
      %p69 = scmp.eq.s32.totalorder %s22, 0
      %p70 = por %p68, %p69
      %s72 = sadd.s32 %s71, 1
      %p75 = scmp.eq.s32.totalorder %s16, 1
      %p76 = scmp.ne.s32.totalorder %s71, %s73
      %p77 = scmp.eq.s32.totalorder %s16, 0
      %p78 = por %p76, %p77
      %p79 = scmp.ne.s32.totalorder %s71, %s73
      %p80 = scmp.eq.s32.totalorder %s21, 1
      %p81 = por %p79, %p80
      %p82 = scmp.ne.s32.totalorder %s73, %s74
      %p83 = scmp.eq.s32.totalorder %s21, 0
      %p84 = por %p82, %p83
      %p85 = scmp.ne.s32.totalorder %s73, %s74
      %p86 = scmp.eq.s32.totalorder %s22, 1
      %p87 = por %p85, %p86
      %p89 = scmp.ne.s32.totalorder %s74, %s88
      %p90 = scmp.eq.s32.totalorder %s22, 0
      %p91 = por %p89, %p90
      %s93 = sadd.s32 %s92, 1
      %p96 = scmp.eq.s32.totalorder %s16, 1
      %p97 = scmp.ne.s32.totalorder %s92, %s94
      %p98 = scmp.eq.s32.totalorder %s16, 0
      %p99 = por %p97, %p98
      %p100 = scmp.ne.s32.totalorder %s92, %s94
      %p101 = scmp.eq.s32.totalorder %s21, 1
      %p102 = por %p100, %p101
      %p103 = scmp.ne.s32.totalorder %s94, %s95
      %p104 = scmp.eq.s32.totalorder %s21, 0
      %p105 = por %p103, %p104
      %p106 = scmp.ne.s32.totalorder %s94, %s95
      %p107 = scmp.eq.s32.totalorder %s22, 1
      %p108 = por %p106, %p107
      %p110 = scmp.ne.s32.totalorder %s95, %s109
      %p111 = scmp.eq.s32.totalorder %s22, 0
      %p112 = por %p110, %p111
      %s114 = sadd.s32 %s113, 1
      %p117 = scmp.eq.s32.totalorder %s16, 1
      %p118 = scmp.ne.s32.totalorder %s113, %s115
      %p119 = scmp.eq.s32.totalorder %s16, 0
      %p120 = por %p118, %p119
      %p121 = scmp.ne.s32.totalorder %s113, %s115
      %p122 = scmp.eq.s32.totalorder %s21, 1
      %p123 = por %p121, %p122
      %p124 = scmp.ne.s32.totalorder %s115, %s116
      %p125 = scmp.eq.s32.totalorder %s21, 0
      %p126 = por %p124, %p125
      %p127 = scmp.ne.s32.totalorder %s115, %s116
      %p128 = scmp.eq.s32.totalorder %s22, 1
      %p129 = por %p127, %p128
      %p131 = scmp.ne.s32.totalorder %s116, %s130
      %p132 = scmp.eq.s32.totalorder %s22, 0
      %p133 = por %p131, %p132
      %s135 = sadd.s32 %s134, 1
      %p138 = scmp.eq.s32.totalorder %s16, 1
      %p139 = scmp.ne.s32.totalorder %s134, %s136
      %p140 = scmp.eq.s32.totalorder %s16, 0
      %p141 = por %p139, %p140
      %p142 = scmp.ne.s32.totalorder %s134, %s136
      %p143 = scmp.eq.s32.totalorder %s21, 1
      %p144 = por %p142, %p143
      %p145 = scmp.ne.s32.totalorder %s136, %s137
      %p146 = scmp.eq.s32.totalorder %s21, 0
      %p147 = por %p145, %p146
      %p148 = scmp.ne.s32.totalorder %s136, %s137
      %p149 = scmp.eq.s32.totalorder %s22, 1
      %p150 = por %p148, %p149
      %p152 = scmp.ne.s32.totalorder %s137, %s151
      %p153 = scmp.eq.s32.totalorder %s22, 0
      %p154 = por %p152, %p153
      %s156 = sadd.s32 %s155, 1
      %p159 = scmp.eq.s32.totalorder %s16, 1
      %p160 = scmp.ne.s32.totalorder %s155, %s157
      %p161 = scmp.eq.s32.totalorder %s16, 0
      %p162 = por %p160, %p161
      %p163 = scmp.ne.s32.totalorder %s155, %s157
      %p164 = scmp.eq.s32.totalorder %s21, 1
      %p165 = por %p163, %p164
      %p166 = scmp.ne.s32.totalorder %s157, %s158
      %p167 = scmp.eq.s32.totalorder %s21, 0
      %p168 = por %p166, %p167
      %p169 = scmp.ne.s32.totalorder %s157, %s158
      %p170 = scmp.eq.s32.totalorder %s22, 1
      %p171 = por %p169, %p170
      %p173 = scmp.ne.s32.totalorder %s158, %s172
      %p174 = scmp.eq.s32.totalorder %s22, 0
      %p175 = por %p173, %p174
      %s176 = ssub.s32 %s16, %s23
      %p177 = scmp.eq.s32.totalorder %s176, 0
      %s179 = sadd.s32 %s178, 1
      %s180 = scalar_select %p177, %s178, %s179
      %p183 = pneg %p177
      %p184 = scmp.eq.s32.totalorder %s16, 1
      %p185 = por %p183, %p184
      %p186 = scmp.ne.s32.totalorder %s178, %s181
      %p187 = scmp.eq.s32.totalorder %s16, 0
      %p188 = por %p186, %p187
      %p189 = scmp.ne.s32.totalorder %s178, %s181
      %p190 = scmp.eq.s32.totalorder %s21, 1
      %p191 = por %p189, %p190
      %p192 = scmp.ne.s32.totalorder %s181, %s182
      %p193 = scmp.eq.s32.totalorder %s21, 0
      %p194 = por %p192, %p193
      %p195 = scmp.ne.s32.totalorder %s181, %s182
      %p196 = scmp.eq.s32.totalorder %s22, 1
      %p197 = por %p195, %p196
      %p199 = scmp.ne.s32.totalorder %s182, %s198
      %p200 = scmp.eq.s32.totalorder %s22, 0
      %p201 = por %p199, %p200
      %p202 = scmp.le.s32.totalorder 1, %s16
      %p203 = scmp.lt.s32.totalorder %s16, 3
      %p204 = pnand %p202, %p203
      %p205 = pneg %p204
      // Predicated region
      $region9: #{tpu_custom_call.1} parent=5 // pred_check
        _
      $region10: #{tpu_custom_call.1} parent=5 // pred_check_branch
        %207 = sbr.rel (%p204) target = $region12
      $region11: #{tpu_custom_call.1} parent=5 // pred_region
        %s208 = ssub.s32 %s16, 1
        // Predicated region
        $region13: #{tpu_custom_call.1} parent=11 // pred_check
          %p209 = pneg %p63
        $region14: #{tpu_custom_call.1} parent=11 // pred_check_branch
          %211 = sbr.rel (%p209) target = $region16
        $region15: #{tpu_custom_call.1} parent=11 // pred_region
          _
        $region16: #{tpu_custom_call.1} parent=11 // pred_fallthru
          _
        // Predicated region
        $region17: #{tpu_custom_call.1} parent=11 // pred_check
          %p212 = pneg %p84
        $region18: #{tpu_custom_call.1} parent=11 // pred_check_branch
          %214 = sbr.rel (%p212) target = $region20
        $region19: #{tpu_custom_call.1} parent=11 // pred_region
          _
        $region20: #{tpu_custom_call.1} parent=11 // pred_fallthru
          _
        // Predicated region
        $region21: #{tpu_custom_call.1} parent=11 // pred_check
          %p215 = pneg %p105
        $region22: #{tpu_custom_call.1} parent=11 // pred_check_branch
          %217 = sbr.rel (%p215) target = $region24
        $region23: #{tpu_custom_call.1} parent=11 // pred_region
          _
        $region24: #{tpu_custom_call.1} parent=11 // pred_fallthru
          _
        // Predicated region
        $region25: #{tpu_custom_call.1} parent=11 // pred_check
          %p218 = pneg %p126
        $region26: #{tpu_custom_call.1} parent=11 // pred_check_branch
          %220 = sbr.rel (%p218) target = $region28
        $region27: #{tpu_custom_call.1} parent=11 // pred_region
          _
        $region28: #{tpu_custom_call.1} parent=11 // pred_fallthru
          _
        // Predicated region
        $region29: #{tpu_custom_call.1} parent=11 // pred_check
          %p221 = pneg %p147
        $region30: #{tpu_custom_call.1} parent=11 // pred_check_branch
          %223 = sbr.rel (%p221) target = $region32
        $region31: #{tpu_custom_call.1} parent=11 // pred_region
          _
        $region32: #{tpu_custom_call.1} parent=11 // pred_fallthru
          _
        // Predicated region
        $region33: #{tpu_custom_call.1} parent=11 // pred_check
          %p224 = pneg %p168
        $region34: #{tpu_custom_call.1} parent=11 // pred_check_branch
          %226 = sbr.rel (%p224) target = $region36
        $region35: #{tpu_custom_call.1} parent=11 // pred_region
          _
        $region36: #{tpu_custom_call.1} parent=11 // pred_fallthru
          _
      $region12: #{tpu_custom_call.1} parent=5 // pred_fallthru
        _
      %p227 = scmp.lt.s32.totalorder %s16, 2
      // Predicated region
      $region37: #{tpu_custom_call.1} parent=5 // pred_check
        %p228 = pneg %p227
      $region38: #{tpu_custom_call.1} parent=5 // pred_check_branch
        %230 = sbr.rel (%p228) target = $region40
      $region39: #{tpu_custom_call.1} parent=5 // pred_region
        // Predicated region
        $region41: #{tpu_custom_call.1} parent=39 // pred_check
          %p231 = pneg %p36
        $region42: #{tpu_custom_call.1} parent=39 // pred_check_branch
          %233 = sbr.rel (%p231) target = $region44
        $region43: #{tpu_custom_call.1} parent=39 // pred_region
          %p234 = scmp.lt.s32.totalorder %s16, 1
          %s235 = scalar_select %p234, %s16, 1
          %s236 = smul.addr %s235, 8
          %s237 = scalar_lea.vmem %s0, %s236
        $region44: #{tpu_custom_call.1} parent=39 // pred_fallthru
          _
      $region40: #{tpu_custom_call.1} parent=5 // pred_fallthru
        _
      %p238 = scmp.le.s32.totalorder 1, %s16
      %p239 = scmp.lt.s32.totalorder %s16, 3
      %p240 = pnand %p238, %p239
      %p241 = pneg %p240
      // Predicated region
      $region45: #{tpu_custom_call.1} parent=5 // pred_check
        _
      $region46: #{tpu_custom_call.1} parent=5 // pred_check_branch
        %243 = sbr.rel (%p240) target = $region48
      $region47: #{tpu_custom_call.1} parent=5 // pred_region
        %s244 = ssub.s32 %s16, 1
        %p245 = scmp.lt.s32.totalorder %s21, 1
        %s246 = scalar_select %p245, %s21, 1
        %s247 = smul.addr %s246, 8
        %s248 = scalar_lea.vmem %s0, %s247
        %p249 = pneg %p42
        %p250 = pneg %p39
        %p251 = pneg %p63
        %p252 = pneg %p60
        %p253 = pneg %p84
        %p254 = pneg %p81
        %p255 = pneg %p105
        %p256 = pneg %p102
        %p257 = pneg %p126
        %p258 = pneg %p123
        %p259 = pneg %p147
        %p260 = pneg %p144
        %p261 = pneg %p168
        %p262 = pneg %p165
        %p263 = pneg %p194
        %p264 = pneg %p191
        %s265 = sand.u32 %s181, 1
        %s266 = scalar_lea.sflag [#allocation3], %s265
        %s267 = sand.u32 %s181, 1
        %s268 = smul.addr %s267, 8
        %s269 = scalar_lea.vmem [#allocation2], %s268
        %p270 = scmp.lt.s32.totalorder %s21, 1
        %s271 = scalar_select %p270, %s21, 1
        %s272 = smul.addr %s271, 8
        %s273 = scalar_lea.vmem %s0, %s272
        %v274 = vld [vmem:[%s273] sm:$0xff]
        %v275 = vld [vmem:[%s1] sm:$0xff]
        %v276 = vld [vmem:[%s1 + $0x8] sm:$0xff]
        %v277 = vld [vmem:[%s1 + $0x10] sm:$0xff]
        %v278 = vld [vmem:[%s1 + $0x18] sm:$0xff]
        %v279 = vld [vmem:[%s1 + $0x20] sm:$0xff]
        %v280 = vld [vmem:[%s1 + $0x28] sm:$0xff]
        %v281 = vld [vmem:[%s1 + $0x30] sm:$0xff]
        %v282 = vld [vmem:[%s1 + $0x38] sm:$0xff]
        %v283 = vld [vmem:[%s3] sm:$0xff]
        %v284 = vld [vmem:[%s3 + $0x8] sm:$0xff]
        %v285 = vld [vmem:[%s3 + $0x10] sm:$0xff]
        %v286 = vld [vmem:[%s3 + $0x18] sm:$0xff]
        %v287 = vld [vmem:[%s3 + $0x20] sm:$0xff]
        %v288 = vld [vmem:[%s3 + $0x28] sm:$0xff]
        %v289 = vld [vmem:[%s3 + $0x30] sm:$0xff]
        %v290 = vld [vmem:[%s3 + $0x38] sm:$0xff]
        %v291 = vld [vmem:[%s3 + $0x40] sm:$0xff]
        %v292 = vld [vmem:[%s3 + $0x48] sm:$0xff]
        %v293 = vld [vmem:[%s3 + $0x50] sm:$0xff]
        %v294 = vld [vmem:[%s3 + $0x58] sm:$0xff]
        %v295 = vld [vmem:[%s3 + $0x60] sm:$0xff]
        %v296 = vld [vmem:[%s3 + $0x68] sm:$0xff]
        %v297 = vld [vmem:[%s3 + $0x70] sm:$0xff]
        %v298 = vld [vmem:[%s3 + $0x78] sm:$0xff]
        %v299 = vld [vmem:[%s2] sm:$0x1]
        %v301 = vlaneseq
        %v302 = vshrl.u32 %v301, 7
        %v303 = vsub.s32 0, %v302
        %v304 = vrot.slane %v299, %v303
        %vm306 = vcmask 261120
        %v308 = vsel %vm306, %v274, 0
        %v311 = vsel %vm306, %v275, 0
        %v314 = vsel %vm306, %v276, 0
        %v317 = vsel %vm306, %v277, 0
        %v320 = vsel %vm306, %v278, 0
        %v323 = vsel %vm306, %v279, 0
        %v326 = vsel %vm306, %v280, 0
        %v329 = vsel %vm306, %v281, 0
        %v332 = vsel %vm306, %v282, 0
        %334 = vmatprep.subr.mxu0 0.0
        %335 = vmatpush1.xpose.msra.mxu0 0.0
        %336 = vmatprep.subr.mxu0 0.0
        %337 = vmatpush1.xpose.msra.mxu0 0.0
        %338 = vmatprep.subr.mxu0 0.0
        %339 = vmatpush1.xpose.msra.mxu0 0.0
        %340 = vmatprep.subr.mxu0 0.0
        %341 = vmatpush1.xpose.msra.mxu0 0.0
        %342 = vmatprep.subr.mxu0 0.0
        %343 = vmatpush1.xpose.msra.mxu0 0.0
        %344 = vmatprep.subr.mxu0 0.0
        %345 = vmatpush1.xpose.msra.mxu0 0.0
        %346 = vmatprep.subr.mxu0 0.0
        %347 = vmatpush1.xpose.msra.mxu0 0.0
        %348 = vmatprep.subr.mxu0 0.0
        %349 = vmatpush1.xpose.msra.mxu0 0.0
        %350 = vmatprep.subr.mxu0 0.0
        %351 = vmatpush1.xpose.msra.mxu0 %v332
        %352 = vmatprep.subr.mxu0 0.0
        %353 = vmatpush1.xpose.msra.mxu0 %v329
        %354 = vmatprep.subr.mxu0 0.0
        %355 = vmatpush1.xpose.msra.mxu0 %v326
        %356 = vmatprep.subr.mxu0 0.0
        %357 = vmatpush1.xpose.msra.mxu0 %v323
        %358 = vmatprep.subr.mxu0 0.0
        %359 = vmatpush1.xpose.msra.mxu0 %v320
        %360 = vmatprep.subr.mxu0 0.0
        %361 = vmatpush1.xpose.msra.mxu0 %v317
        %362 = vmatprep.subr.mxu0 0.0
        %363 = vmatpush1.xpose.msra.mxu0 %v314
        %364 = vmatprep.subr.mxu0 0.0
        %365 = vmatpush1.xpose.msra.mxu0 %v311
        %366 = vmatprep.subr.mxu0 0.0
        %367 = vmatpush2.xpose.msra.mxu0 0.0
        %368 = vmatprep.subr.mxu0 0.0
        %369 = vmatpush2.xpose.msra.mxu0 0.0
        %370 = vmatprep.subr.mxu0 0.0
        %371 = vmatpush2.xpose.msra.mxu0 0.0
        %372 = vmatprep.subr.mxu0 0.0
        %373 = vmatpush2.xpose.msra.mxu0 0.0
        %374 = vmatprep.subr.mxu0 0.0
        %375 = vmatpush2.xpose.msra.mxu0 0.0
        %376 = vmatprep.subr.mxu0 0.0
        %377 = vmatpush2.xpose.msra.mxu0 0.0
        %378 = vmatprep.subr.mxu0 0.0
        %379 = vmatpush2.xpose.msra.mxu0 0.0
        %380 = vmatprep.subr.mxu0 0.0
        %381 = vmatpush2.xpose.msra.mxu0 0.0
        %382 = vmatprep.subr.mxu0 0.0
        %383 = vmatpush2.xpose.msra.mxu0 0.0
        %384 = vmatprep.subr.mxu0 0.0
        %385 = vmatpush2.xpose.msra.mxu0 0.0
        %386 = vmatprep.subr.mxu0 0.0
        %387 = vmatpush2.xpose.msra.mxu0 0.0
        %388 = vmatprep.subr.mxu0 0.0
        %389 = vmatpush2.xpose.msra.mxu0 0.0
        %390 = vmatprep.subr.mxu0 0.0
        %391 = vmatpush2.xpose.msra.mxu0 0.0
        %392 = vmatprep.subr.mxu0 0.0
        %393 = vmatpush2.xpose.msra.mxu0 0.0
        %394 = vmatprep.subr.mxu0 0.0
        %395 = vmatpush2.xpose.msra.mxu0 0.0
        %396 = vmatprep.subr.mxu0 0.0
        %397 = vmatpush2.xpose.msra.mxu0 0.0
        %398 = vmatprep.mubr.f32.mxu0 0.0
        %399 = vmatmul.mubr.f32.gmra.mxu0 %v308
        %v400 = vpop.f32.mrf.mxu0
        %v401 = vadd.f32 %v304, %v400
        %v402 = vpop.f32.mrf.mxu0
        %403 = vdwg.mxu0
        %v404 = vmax.f32 %v401, 0.0
        %vm405 = vcmask 523264
        %v406 = vsel %vm405, %v404, 0.0
        %407 = vadd.xlane.f32.xlu0 %v406
        %v408 = vpop.xlane.xlu0 %407
        %v409 = vmul.f32 %v404, %v404
        %v410 = vsel %vm405, %v409, 0.0
        %411 = vadd.xlane.f32.xlu0 %v410
        %v412 = vpop.xlane.xlu0 %411
        %v413 = vmul.f32 %v408, 0.015625
        %v414 = vmul.f32 %v412, 0.015625
        %v415 = vmul.f32 %v413, %v413
        %v416 = vsub.f32 %v414, %v415
        %v417 = vmax.f32 %v416, 0.0
        %v418 = vsub.f32 %v404, %v413
        %v419 = vadd.f32 %v417, 1e-05
        %v420 = vrsqrt.pop %v419
        %v421 = vmul.f32 %v418, %v420
        %v422 = vld [vmem:[%s5] sm:$0x1]
        %v424 = vlaneseq
        %v425 = vshrl.u32 %v424, 7
        %v426 = vsub.s32 0, %v425
        %v427 = vrot.slane %v422, %v426
        %v429 = vmul.f32 %v421, %v427
        %v430 = vld [vmem:[%s6] sm:$0x1]
        %v432 = vlaneseq
        %v433 = vshrl.u32 %v432, 7
        %v434 = vsub.s32 0, %v433
        %v435 = vrot.slane %v430, %v434
        %v437 = vadd.f32 %v429, %v435
        %v438 = vld [vmem:[%s4] sm:$0x1]
        %v440 = vlaneseq
        %v441 = vshrl.u32 %v440, 7
        %v442 = vsub.s32 0, %v441
        %v443 = vrot.slane %v438, %v442
        %v446 = vsel %vm405, %v437, 0
        %v449 = vsel %vm405, %v283, 0
        %v452 = vsel %vm405, %v284, 0
        %v455 = vsel %vm405, %v285, 0
        %v458 = vsel %vm405, %v286, 0
        %v461 = vsel %vm405, %v287, 0
        %v464 = vsel %vm405, %v288, 0
        %v467 = vsel %vm405, %v289, 0
        %v470 = vsel %vm405, %v290, 0
        %v473 = vsel %vm405, %v291, 0
        %v476 = vsel %vm405, %v292, 0
        %v479 = vsel %vm405, %v293, 0
        %v482 = vsel %vm405, %v294, 0
        %v485 = vsel %vm405, %v295, 0
        %v488 = vsel %vm405, %v296, 0
        %v491 = vsel %vm405, %v297, 0
        %v494 = vsel %vm405, %v298, 0
        %496 = vmatprep.subr.mxu0 0.0
        %497 = vmatpush1.xpose.msra.mxu0 %v494
        %498 = vmatprep.subr.mxu0 0.0
        %499 = vmatpush1.xpose.msra.mxu0 %v491
        %500 = vmatprep.subr.mxu0 0.0
        %501 = vmatpush1.xpose.msra.mxu0 %v488
        %502 = vmatprep.subr.mxu0 0.0
        %503 = vmatpush1.xpose.msra.mxu0 %v485
        %504 = vmatprep.subr.mxu0 0.0
        %505 = vmatpush1.xpose.msra.mxu0 %v482
        %506 = vmatprep.subr.mxu0 0.0
        %507 = vmatpush1.xpose.msra.mxu0 %v479
        %508 = vmatprep.subr.mxu0 0.0
        %509 = vmatpush1.xpose.msra.mxu0 %v476
        %510 = vmatprep.subr.mxu0 0.0
        %511 = vmatpush1.xpose.msra.mxu0 %v473
        %512 = vmatprep.subr.mxu0 0.0
        %513 = vmatpush1.xpose.msra.mxu0 %v470
        %514 = vmatprep.subr.mxu0 0.0
        %515 = vmatpush1.xpose.msra.mxu0 %v467
        %516 = vmatprep.subr.mxu0 0.0
        %517 = vmatpush1.xpose.msra.mxu0 %v464
        %518 = vmatprep.subr.mxu0 0.0
        %519 = vmatpush1.xpose.msra.mxu0 %v461
        %520 = vmatprep.subr.mxu0 0.0
        %521 = vmatpush1.xpose.msra.mxu0 %v458
        %522 = vmatprep.subr.mxu0 0.0
        %523 = vmatpush1.xpose.msra.mxu0 %v455
        %524 = vmatprep.subr.mxu0 0.0
        %525 = vmatpush1.xpose.msra.mxu0 %v452
        %526 = vmatprep.subr.mxu0 0.0
        %527 = vmatpush1.xpose.msra.mxu0 %v449
        %528 = vmatprep.subr.mxu0 0.0
        %529 = vmatpush2.xpose.msra.mxu0 0.0
        %530 = vmatprep.subr.mxu0 0.0
        %531 = vmatpush2.xpose.msra.mxu0 0.0
        %532 = vmatprep.subr.mxu0 0.0
        %533 = vmatpush2.xpose.msra.mxu0 0.0
        %534 = vmatprep.subr.mxu0 0.0
        %535 = vmatpush2.xpose.msra.mxu0 0.0
        %536 = vmatprep.subr.mxu0 0.0
        %537 = vmatpush2.xpose.msra.mxu0 0.0
        %538 = vmatprep.subr.mxu0 0.0
        %539 = vmatpush2.xpose.msra.mxu0 0.0
        %540 = vmatprep.subr.mxu0 0.0
        %541 = vmatpush2.xpose.msra.mxu0 0.0
        %542 = vmatprep.subr.mxu0 0.0
        %543 = vmatpush2.xpose.msra.mxu0 0.0
        %544 = vmatprep.subr.mxu0 0.0
        %545 = vmatpush2.xpose.msra.mxu0 0.0
        %546 = vmatprep.subr.mxu0 0.0
        %547 = vmatpush2.xpose.msra.mxu0 0.0
        %548 = vmatprep.subr.mxu0 0.0
        %549 = vmatpush2.xpose.msra.mxu0 0.0
        %550 = vmatprep.subr.mxu0 0.0
        %551 = vmatpush2.xpose.msra.mxu0 0.0
        %552 = vmatprep.subr.mxu0 0.0
        %553 = vmatpush2.xpose.msra.mxu0 0.0
        %554 = vmatprep.subr.mxu0 0.0
        %555 = vmatpush2.xpose.msra.mxu0 0.0
        %556 = vmatprep.subr.mxu0 0.0
        %557 = vmatpush2.xpose.msra.mxu0 0.0
        %558 = vmatprep.subr.mxu0 0.0
        %559 = vmatpush2.xpose.msra.mxu0 0.0
        %560 = vmatprep.mubr.f32.mxu0 0.0
        %561 = vmatmul.mubr.f32.gmra.mxu0 %v446
        %v562 = vpop.f32.mrf.mxu0
        %v563 = vadd.f32 %v443, %v562
        %v564 = vpop.f32.mrf.mxu0
        %565 = vdwg.mxu0
        %566 = vst [vmem:[%s269] sm:$0xff] %v563
        %s567 = sand.u32 %s181, 1
        %s568 = scalar_lea.sflag [#allocation3], %s567
        %s569 = sand.u32 %s181, 1
        %s570 = smul.addr %s569, 8
        %s571 = scalar_lea.vmem [#allocation2], %s570
        // Predicated region
        $region49: #{tpu_custom_call.1} parent=47 // pred_check
          %p572 = pneg %p191
        $region50: #{tpu_custom_call.1} parent=47 // pred_check_branch
          %574 = sbr.rel (%p572) target = $region52
        $region51: #{tpu_custom_call.1} parent=47 // pred_region
          %s576 = ssub.s32 128, 128
          %577 = vsyncadd %s568, %s576
          %s578 = smul.addr %s21, 128
          %s579 = scalar_lea.hbm %s7, %s578
          %s581 = sshll.u32 %s571, 4
          %s582 = int_to_ptr.vmem [resolvable:$true] %s581
          %584 = dma.vmem_to_hbm [thread:$0]  %s582, 128, %s579, %s568
        $region52: #{tpu_custom_call.1} parent=47 // pred_fallthru
          _
      $region48: #{tpu_custom_call.1} parent=5 // pred_fallthru
        _
      %p585 = scmp.le.s32.totalorder 2, %s16
      // Predicated region
      $region53: #{tpu_custom_call.1} parent=5 // pred_check
        %p586 = pneg %p585
      $region54: #{tpu_custom_call.1} parent=5 // pred_check_branch
        %588 = sbr.rel (%p586) target = $region56
      $region55: #{tpu_custom_call.1} parent=5 // pred_region
        %s589 = ssub.s32 %s16, 2
        // Predicated region
        $region57: #{tpu_custom_call.1} parent=55 // pred_check
          %p590 = pneg %p197
        $region58: #{tpu_custom_call.1} parent=55 // pred_check_branch
          %592 = sbr.rel (%p590) target = $region60
        $region59: #{tpu_custom_call.1} parent=55 // pred_region
          %s593 = sand.u32 %s182, 1
          %s594 = scalar_lea.sflag [#allocation3], %s593
          %s595 = sand.u32 %s182, 1
          %s596 = smul.addr %s595, 8
          %s597 = scalar_lea.vmem [#allocation2], %s596
          %598 = dma.done %s594, 128
        $region60: #{tpu_custom_call.1} parent=55 // pred_fallthru
          _
      $region56: #{tpu_custom_call.1} parent=5 // pred_fallthru
        _
    $region6: #{tpu_custom_call.1} parent=1 // loop_footer
      %s20 = sadd.s32 1, %s16
    $region7: #{tpu_custom_call.1} parent=1 // loop_footer_branch
      %15 = sbr.rel target = $region3
    $region8: #{tpu_custom_call.1} parent=1 // loop_exit
      _
    %599 = vsyncpa [#allocation3], 1
    %s600 = scalar_lea.sflag [#allocation3], 1
    %601 = vsyncpa %s600, 1

</llo_original>
